<compile_context>
chip_gen: v7x
topology: tpu7x:2x2x1
jax: 0.10.0
libtpu: 0.0.40
codegen_flags: <defaults>
</compile_context>

<pallas_src>
import numpy as np
import jax
import jax.numpy as jnp
from jax import lax
from jax.experimental import pallas as pl
from jax.experimental.pallas import tpu as pltpu

_TB_MAX = 512  # batch rows per grid step (multiple of 8); full batch if smaller


def _policy_kernel(x_ref, w1_ref, b1_ref, wh_ref, bh_ref, out_ref):
    # fc1 + ReLU  (MXU matmul, VPU elementwise)
    x = x_ref[...]
    h = jnp.dot(x, w1_ref[...], preferred_element_type=jnp.float32) + b1_ref[...]
    h = jnp.maximum(h, 0.0)

    # Fused head: one matmul produces [mu_lin | std_lin] side by side.
    head = jnp.dot(h, wh_ref[...], preferred_element_type=jnp.float32) + bh_ref[...]

    action_dim = out_ref.shape[1] // 2

    # mu = (tanh(.) + 1) * pi ;  std = softplus(.)  (numerically stable form).
    mu_full = (jnp.tanh(head) + 1.0) * jnp.float32(np.pi)
    std_full = jnp.maximum(head, 0.0) + jnp.log1p(jnp.exp(-jnp.abs(head)))

    # Select per lane: first half of the slab is mu, second half is std.
    lane = lax.broadcasted_iota(jnp.int32, head.shape, 1)
    out_ref[...] = jnp.where(lane < action_dim, mu_full, std_full)


def policy_net_continuous(x, params):
    """Forward pass. x: (B, state_dim) f32. Returns (mu, std), each (B, action_dim)."""
    w1, b1, wmu, bmu, wstd, bstd = params
    B = x.shape[0]
    state_dim = w1.shape[0]
    hidden_dim = w1.shape[1]
    action_dim = wmu.shape[1]
    out_dim = 2 * action_dim

    # Fuse the two head projections into one lane-denser matmul (done once per
    # call in the wrapper; under jit with fixed params XLA folds/fuses this).
    wh = jnp.concatenate([wmu, wstd], axis=1)                     # (H, 2A)
    bh = jnp.concatenate([bmu, bstd], axis=0).reshape(1, out_dim)  # (1, 2A)
    b1_2d = b1.reshape(1, hidden_dim)

    # Batch tiling: big tiles pipeline well; pad B up to a multiple of TB.
    if B <= _TB_MAX:
        tb = B               # block equals full array dim -> layout constraint OK
        b_pad = B
        x_p = x
    else:
        tb = _TB_MAX
        b_pad = ((B + tb - 1) // tb) * tb
        x_p = jnp.pad(x, ((0, b_pad - B), (0, 0))) if b_pad != B else x
    num_tiles = b_pad // tb

    packed = pl.pallas_call(
        _policy_kernel,
        out_shape=jax.ShapeDtypeStruct((b_pad, out_dim), jnp.float32),
        grid=(num_tiles,),
        in_specs=[
            pl.BlockSpec((tb, state_dim), lambda i: (i, 0)),        # x: streamed
            pl.BlockSpec((state_dim, hidden_dim), lambda i: (0, 0)),  # resident
            pl.BlockSpec((1, hidden_dim), lambda i: (0, 0)),          # resident
            pl.BlockSpec((hidden_dim, out_dim), lambda i: (0, 0)),    # resident
            pl.BlockSpec((1, out_dim), lambda i: (0, 0)),             # resident
        ],
        out_specs=pl.BlockSpec((tb, out_dim), lambda i: (i, 0)),
        compiler_params=pltpu.CompilerParams(
            dimension_semantics=("parallel",)),
    )(x_p, w1, b1_2d, wh, bh)

    mu = packed[:B, :action_dim]
    std = packed[:B, action_dim:]
    return mu, std


def init_params(key, state_dim, hidden_dim, action_dim):
    """Deterministic init; weights stored as (in, out) = transpose of PyTorch layout."""
    ks = jax.random.split(key, 6)

    def lin(kw, kb, fan_in, fan_out):
        bound = 1.0 / np.sqrt(fan_in)
        w = jax.random.uniform(kw, (fan_in, fan_out), jnp.float32, -bound, bound)
        b = jax.random.uniform(kb, (fan_out,), jnp.float32, -bound, bound)
        return w, b

    w1, b1 = lin(ks[0], ks[1], state_dim, hidden_dim)
    wmu, bmu = lin(ks[2], ks[3], hidden_dim, action_dim)
    wstd, bstd = lin(ks[4], ks[5], hidden_dim, action_dim)
    return (w1, b1, wmu, bmu, wstd, bstd)


def _reference(x, params):
    w1, b1, wmu, bmu, wstd, bstd = params
    h = jax.nn.relu(x @ w1 + b1)
    mu = (jnp.tanh(h @ wmu + bmu) + 1.0) * np.pi
    std = jax.nn.softplus(h @ wstd + bstd)
    return mu, std


if __name__ == "__main__":
    state_dim, hidden_dim, action_dim = 16, 32, 8
    key = jax.random.PRNGKey(0)
    kx, kp, kx2 = jax.random.split(key, 3)
    params = init_params(kp, state_dim, hidden_dim, action_dim)

    # Small batch (single block, block shape == full array dims).
    batch = 2
    x = jax.random.normal(kx, (batch, state_dim), jnp.float32)
    mu, std = policy_net_continuous(x, params)
    jax.block_until_ready((mu, std))
    mu_ref, std_ref = _reference(x, params)
    assert jnp.allclose(mu, mu_ref, atol=1e-5, rtol=1e-5), "mu mismatch (small batch)"
    assert jnp.allclose(std, std_ref, atol=1e-5, rtol=1e-5), "std mismatch (small batch)"

    # Larger, non-multiple batch exercises the tiled + padded pipeline path.
    batch2 = 1027
    x2 = jax.random.normal(kx2, (batch2, state_dim), jnp.float32)
    mu2, std2 = policy_net_continuous(x2, params)
    jax.block_until_ready((mu2, std2))
    mu2_ref, std2_ref = _reference(x2, params)
    assert jnp.allclose(mu2, mu2_ref, atol=1e-5, rtol=1e-5), "mu mismatch (tiled batch)"
    assert jnp.allclose(std2, std2_ref, atol=1e-5, rtol=1e-5), "std mismatch (tiled batch)"

    print("KERNEL_OK")
</pallas_src>

<mosaic_0001>
module attributes {stable_mosaic.version = 11 : i64} {
  func.func @_policy_kernel(%arg0: i32, %arg1: memref<2x16xf32, #tpu.memory_space<vmem>>, %arg2: memref<16x32xf32, #tpu.memory_space<vmem>>, %arg3: memref<1x32xf32, #tpu.memory_space<vmem>>, %arg4: memref<32x16xf32, #tpu.memory_space<vmem>>, %arg5: memref<1x16xf32, #tpu.memory_space<vmem>>, %arg6: memref<2x16xf32, #tpu.memory_space<vmem>>) attributes {dimension_semantics = [#tpu.dimension_semantics<parallel>], iteration_bounds = array<i64: 1>, scalar_prefetch = 0 : i64, scratch_operands = 0 : i64, tpu.core_type = #tpu.core_type<tc>, window_params = [{transform_indices = @transform_0, window_bounds = array<i64: 2, 16>}, {pipeline_mode = #tpu.pipeline_mode<synchronous>, transform_indices = @transform_1, window_bounds = array<i64: 16, 32>}, {pipeline_mode = #tpu.pipeline_mode<synchronous>, transform_indices = @transform_2, window_bounds = array<i64: 1, 32>}, {pipeline_mode = #tpu.pipeline_mode<synchronous>, transform_indices = @transform_3, window_bounds = array<i64: 32, 16>}, {pipeline_mode = #tpu.pipeline_mode<synchronous>, transform_indices = @transform_4, window_bounds = array<i64: 1, 16>}, {transform_indices = @transform_5, window_bounds = array<i64: 2, 16>}]} {
    %c0 = arith.constant 0 : index
    %c0_0 = arith.constant 0 : index
    %0 = vector.load %arg1[%c0, %c0_0] : memref<2x16xf32, #tpu.memory_space<vmem>>, vector<2x16xf32>
    %c0_1 = arith.constant 0 : index
    %c0_2 = arith.constant 0 : index
    %1 = vector.load %arg2[%c0_1, %c0_2] : memref<16x32xf32, #tpu.memory_space<vmem>>, vector<16x32xf32>
    %cst = arith.constant dense<0.000000e+00> : vector<2x32xf32>
    %2 = tpu.matmul %0, %1, %cst {dimension_numbers = #tpu.dot_dimension_numbers<[1], [0], [0], [1], [0, 0, 1, 1], [], []>} : vector<2x16xf32>, vector<16x32xf32>, vector<2x32xf32> -> vector<2x32xf32>
    %c0_3 = arith.constant 0 : index
    %c0_4 = arith.constant 0 : index
    %3 = vector.load %arg3[%c0_3, %c0_4] : memref<1x32xf32, #tpu.memory_space<vmem>>, vector<1x32xf32>
    %4 = vector.broadcast %3 : vector<1x32xf32> to vector<2x32xf32>
    %5 = arith.addf %2, %4 : vector<2x32xf32>
    %cst_5 = arith.constant 0.000000e+00 : f32
    %6 = vector.broadcast %cst_5 : f32 to vector<2x32xf32>
    %7 = arith.maximumf %5, %6 : vector<2x32xf32>
    %c0_6 = arith.constant 0 : index
    %c0_7 = arith.constant 0 : index
    %8 = vector.load %arg4[%c0_6, %c0_7] : memref<32x16xf32, #tpu.memory_space<vmem>>, vector<32x16xf32>
    %cst_8 = arith.constant dense<0.000000e+00> : vector<2x16xf32>
    %9 = tpu.matmul %7, %8, %cst_8 {dimension_numbers = #tpu.dot_dimension_numbers<[1], [0], [0], [1], [0, 0, 1, 1], [], []>} : vector<2x32xf32>, vector<32x16xf32>, vector<2x16xf32> -> vector<2x16xf32>
    %c0_9 = arith.constant 0 : index
    %c0_10 = arith.constant 0 : index
    %10 = vector.load %arg5[%c0_9, %c0_10] : memref<1x16xf32, #tpu.memory_space<vmem>>, vector<1x16xf32>
    %11 = vector.broadcast %10 : vector<1x16xf32> to vector<2x16xf32>
    %12 = arith.addf %9, %11 : vector<2x16xf32>
    %13 = math.tanh %12 : vector<2x16xf32>
    %cst_11 = arith.constant 1.000000e+00 : f32
    %14 = vector.broadcast %cst_11 : f32 to vector<2x16xf32>
    %15 = arith.addf %13, %14 : vector<2x16xf32>
    %cst_12 = arith.constant 3.14159274 : f32
    %16 = vector.broadcast %cst_12 : f32 to vector<2x16xf32>
    %17 = arith.mulf %15, %16 : vector<2x16xf32>
    %cst_13 = arith.constant 0.000000e+00 : f32
    %18 = vector.broadcast %cst_13 : f32 to vector<2x16xf32>
    %19 = arith.maximumf %12, %18 : vector<2x16xf32>
    %20 = math.absf %12 : vector<2x16xf32>
    %cst_14 = arith.constant 0.000000e+00 : f32
    %21 = vector.broadcast %cst_14 : f32 to vector<2x16xf32>
    %22 = arith.subf %21, %20 : vector<2x16xf32>
    %23 = math.exp %22 : vector<2x16xf32>
    %24 = math.log1p %23 : vector<2x16xf32>
    %25 = arith.addf %19, %24 : vector<2x16xf32>
    %26 = tpu.iota {dimensions = array<i32: 1>} : vector<2x16xi32>
    %c8_i32 = arith.constant 8 : i32
    %27 = vector.broadcast %c8_i32 : i32 to vector<2x16xi32>
    %28 = arith.cmpi slt, %26, %27 : vector<2x16xi32>
    %29 = arith.select %28, %17, %25 : vector<2x16xi1>, vector<2x16xf32>
    %c0_15 = arith.constant 0 : index
    %c0_16 = arith.constant 0 : index
    %30 = vector.load %arg6[%c0_15, %c0_16] : memref<2x16xf32, #tpu.memory_space<vmem>>, vector<2x16xf32>
    tpu.vector_store %arg6[%c0_15, %c0_16], %29 {strides = array<i32>} : memref<2x16xf32, #tpu.memory_space<vmem>>, vector<2x16xf32>,
    return
  }
  func.func @transform_0(%arg0: i32) -> (i32, i32) {
    %c0_i32 = arith.constant 0 : i32
    %c0_i32_0 = arith.constant 0 : i32
    return %arg0, %c0_i32 : i32, i32
  }
  func.func @transform_1(%arg0: i32) -> (i32, i32) {
    %c0_i32 = arith.constant 0 : i32
    %c0_i32_0 = arith.constant 0 : i32
    %c0_i32_1 = arith.constant 0 : i32
    return %c0_i32, %c0_i32_0 : i32, i32
  }
  func.func @transform_2(%arg0: i32) -> (i32, i32) {
    %c0_i32 = arith.constant 0 : i32
    %c0_i32_0 = arith.constant 0 : i32
    %c0_i32_1 = arith.constant 0 : i32
    return %c0_i32, %c0_i32_0 : i32, i32
  }
  func.func @transform_3(%arg0: i32) -> (i32, i32) {
    %c0_i32 = arith.constant 0 : i32
    %c0_i32_0 = arith.constant 0 : i32
    %c0_i32_1 = arith.constant 0 : i32
    return %c0_i32, %c0_i32_0 : i32, i32
  }
  func.func @transform_4(%arg0: i32) -> (i32, i32) {
    %c0_i32 = arith.constant 0 : i32
    %c0_i32_0 = arith.constant 0 : i32
    %c0_i32_1 = arith.constant 0 : i32
    return %c0_i32, %c0_i32_0 : i32, i32
  }
  func.func @transform_5(%arg0: i32) -> (i32, i32) {
    %c0_i32 = arith.constant 0 : i32
    %c0_i32_0 = arith.constant 0 : i32
    return %arg0, %c0_i32 : i32, i32
  }
}

</mosaic_0001>

<llo_original>
// kernel: tpu_custom_call.1
$region0: #{tpu_custom_call.1}
  #allocation0 [shape = 'u32[]', space=smem, size = 0x4, offset = 0x4, fixed_abs, tag = 'smem constant byte address 0x4 - core index']
  #allocation1 [shape = 'u32[144,128]{1,0:T(1,128)}', space=vmem, size = 0x12000, scoped, tag = 'internal scratch']
  %s0 = inlined_call_operand.vmem [shape: f32[2,16], index: 0, kind: input, shape index: {}]
  %s1 = inlined_call_operand.vmem [shape: f32[16,32], index: 1, kind: input, shape index: {}]
  %s2 = inlined_call_operand.vmem [shape: f32[1,32], index: 2, kind: input, shape index: {}]
  %s3 = inlined_call_operand.vmem [shape: f32[32,16], index: 3, kind: input, shape index: {}]
  %s4 = inlined_call_operand.vmem [shape: f32[1,16], index: 4, kind: input, shape index: {}]
  %s5 = inlined_call_operand.hbm [shape: f32[2,16], index: 5, kind: output, shape index: {}]
  %s6 = sld [smem:[#allocation0]]
  $region30: #{tpu_custom_call.1} parent=0
    _
  %s8 = ssub.s32 1, %s6
  %s9 = scalar_select 0, %s8, %s6
  $region1: #{tpu_custom_call.1} parent=0
    #allocation2 [shape = 'u8[1024]{0}', space=vmem, size = 0x400, scoped, tag = 'output window, operand 0, single buffered']
    #allocation3 [shape = 's32[1]{0}', space=sflag, size = 0x4, scoped, tag = 'scoped memory for tpu_custom_call.1']
    %10 = vsyncpa [#allocation3], 0
    // Predicated region
    $region2: #{tpu_custom_call.1} parent=1 // pred_check
      _
    $region3: #{tpu_custom_call.1} parent=1 // pred_check_branch
      %12 = sbr.rel (0) target = $region5
    $region4: #{tpu_custom_call.1} parent=1 // pred_region
      _
    $region5: #{tpu_custom_call.1} parent=1 // pred_fallthru
      _
    // Predicated region
    $region6: #{tpu_custom_call.1} parent=1 // pred_check
      _
    $region7: #{tpu_custom_call.1} parent=1 // pred_check_branch
      %14 = sbr.rel (0) target = $region9
    $region8: #{tpu_custom_call.1} parent=1 // pred_region
      _
    $region9: #{tpu_custom_call.1} parent=1 // pred_fallthru
      _
    // Predicated region
    $region10: #{tpu_custom_call.1} parent=1 // pred_check
      _
    $region11: #{tpu_custom_call.1} parent=1 // pred_check_branch
      %16 = sbr.rel (0) target = $region13
    $region12: #{tpu_custom_call.1} parent=1 // pred_region
      _
    $region13: #{tpu_custom_call.1} parent=1 // pred_fallthru
      _
    // Predicated region
    $region14: #{tpu_custom_call.1} parent=1 // pred_check
      _
    $region15: #{tpu_custom_call.1} parent=1 // pred_check_branch
      %18 = sbr.rel (0) target = $region17
    $region16: #{tpu_custom_call.1} parent=1 // pred_region
      _
    $region17: #{tpu_custom_call.1} parent=1 // pred_fallthru
      _
    // Predicated region
    $region18: #{tpu_custom_call.1} parent=1 // pred_check
      _
    $region19: #{tpu_custom_call.1} parent=1 // pred_check_branch
      %20 = sbr.rel (0) target = $region21
    $region20: #{tpu_custom_call.1} parent=1 // pred_region
      _
    $region21: #{tpu_custom_call.1} parent=1 // pred_fallthru
      _
    %v21 = vld [vmem:[%s0] sm:$0x3]
    %v22 = vld [vmem:[%s1] sm:$0xff]
    %v23 = vld [vmem:[%s1 + $0x8] sm:$0xff]
    %v24 = vld [vmem:[%s2] sm:$0x1]
    %v26 = vlaneseq
    %v27 = vshrl.u32 %v26, 7
    %v28 = vsub.s32 0, %v27
    %v29 = vrot.slane %v24, %v28
    %vm31 = vcmask 130048
    %v33 = vsel %vm31, %v21, 0
    %35 = vmatprep.subr.mxu0 0.0
    %36 = vmatpush1.msra.mxu0 %v22
    %37 = vmatprep.subr.mxu0 0.0
    %38 = vmatpush1.msra.mxu0 %v23
    %39 = vmatprep.subr.mxu0 0.0
    %40 = vmatpush1.msra.mxu0 0.0
    %41 = vmatprep.subr.mxu0 0.0
    %42 = vmatpush1.msra.mxu0 0.0
    %43 = vmatprep.subr.mxu0 0.0
    %44 = vmatpush1.msra.mxu0 0.0
    %45 = vmatprep.subr.mxu0 0.0
    %46 = vmatpush1.msra.mxu0 0.0
    %47 = vmatprep.subr.mxu0 0.0
    %48 = vmatpush1.msra.mxu0 0.0
    %49 = vmatprep.subr.mxu0 0.0
    %50 = vmatpush1.msra.mxu0 0.0
    %51 = vmatprep.subr.mxu0 0.0
    %52 = vmatpush1.msra.mxu0 0.0
    %53 = vmatprep.subr.mxu0 0.0
    %54 = vmatpush1.msra.mxu0 0.0
    %55 = vmatprep.subr.mxu0 0.0
    %56 = vmatpush1.msra.mxu0 0.0
    %57 = vmatprep.subr.mxu0 0.0
    %58 = vmatpush1.msra.mxu0 0.0
    %59 = vmatprep.subr.mxu0 0.0
    %60 = vmatpush1.msra.mxu0 0.0
    %61 = vmatprep.subr.mxu0 0.0
    %62 = vmatpush1.msra.mxu0 0.0
    %63 = vmatprep.subr.mxu0 0.0
    %64 = vmatpush1.msra.mxu0 0.0
    %65 = vmatprep.subr.mxu0 0.0
    %66 = vmatpush1.msra.mxu0 0.0
    %67 = vmatprep.subr.mxu0 0.0
    %68 = vmatpush1.msra.mxu0 0.0
    %69 = vmatprep.subr.mxu0 0.0
    %70 = vmatpush1.msra.mxu0 0.0
    %71 = vmatprep.subr.mxu0 0.0
    %72 = vmatpush1.msra.mxu0 0.0
    %73 = vmatprep.subr.mxu0 0.0
    %74 = vmatpush1.msra.mxu0 0.0
    %75 = vmatprep.subr.mxu0 0.0
    %76 = vmatpush1.msra.mxu0 0.0
    %77 = vmatprep.subr.mxu0 0.0
    %78 = vmatpush1.msra.mxu0 0.0
    %79 = vmatprep.subr.mxu0 0.0
    %80 = vmatpush1.msra.mxu0 0.0
    %81 = vmatprep.subr.mxu0 0.0
    %82 = vmatpush1.msra.mxu0 0.0
    %83 = vmatprep.subr.mxu0 0.0
    %84 = vmatpush1.msra.mxu0 0.0
    %85 = vmatprep.subr.mxu0 0.0
    %86 = vmatpush1.msra.mxu0 0.0
    %87 = vmatprep.subr.mxu0 0.0
    %88 = vmatpush1.msra.mxu0 0.0
    %89 = vmatprep.subr.mxu0 0.0
    %90 = vmatpush1.msra.mxu0 0.0
    %91 = vmatprep.subr.mxu0 0.0
    %92 = vmatpush1.msra.mxu0 0.0
    %93 = vmatprep.subr.mxu0 0.0
    %94 = vmatpush1.msra.mxu0 0.0
    %95 = vmatprep.subr.mxu0 0.0
    %96 = vmatpush1.msra.mxu0 0.0
    %97 = vmatprep.subr.mxu0 0.0
    %98 = vmatpush1.msra.mxu0 0.0
    %99 = vmatprep.mubr.f32.mxu0 0.0
    %100 = vmatmul.mubr.f32.gmra.mrb[0].mxu0 %v33
    %v101 = vpop.f32.mrb[0].mxu0
    %v102 = vadd.f32 %v29, %v101
    %v103 = vpop.f32.mrb[0].mxu0
    %104 = vdwg.mxu0
    %v105 = vmax.f32 %v102, 0.0
    %v106 = vld [vmem:[%s3] sm:$0xff]
    %v107 = vld [vmem:[%s3 + $0x8] sm:$0xff]
    %v108 = vld [vmem:[%s3 + $0x10] sm:$0xff]
    %v109 = vld [vmem:[%s3 + $0x18] sm:$0xff]
    %v110 = vld [vmem:[%s4] sm:$0x1]
    %v112 = vlaneseq
    %v113 = vshrl.u32 %v112, 7
    %v114 = vsub.s32 0, %v113
    %v115 = vrot.slane %v110, %v114
    %vm117 = vcmask 261120
    %v119 = vsel %vm117, %v105, 0
    %121 = vmatprep.subr.mxu0 0.0
    %122 = vmatpush1.msra.mxu0 %v106
    %123 = vmatprep.subr.mxu0 0.0
    %124 = vmatpush1.msra.mxu0 %v107
    %125 = vmatprep.subr.mxu0 0.0
    %126 = vmatpush1.msra.mxu0 %v108
    %127 = vmatprep.subr.mxu0 0.0
    %128 = vmatpush1.msra.mxu0 %v109
    %129 = vmatprep.subr.mxu0 0.0
    %130 = vmatpush1.msra.mxu0 0.0
    %131 = vmatprep.subr.mxu0 0.0
    %132 = vmatpush1.msra.mxu0 0.0
    %133 = vmatprep.subr.mxu0 0.0
    %134 = vmatpush1.msra.mxu0 0.0
    %135 = vmatprep.subr.mxu0 0.0
    %136 = vmatpush1.msra.mxu0 0.0
    %137 = vmatprep.subr.mxu0 0.0
    %138 = vmatpush1.msra.mxu0 0.0
    %139 = vmatprep.subr.mxu0 0.0
    %140 = vmatpush1.msra.mxu0 0.0
    %141 = vmatprep.subr.mxu0 0.0
    %142 = vmatpush1.msra.mxu0 0.0
    %143 = vmatprep.subr.mxu0 0.0
    %144 = vmatpush1.msra.mxu0 0.0
    %145 = vmatprep.subr.mxu0 0.0
    %146 = vmatpush1.msra.mxu0 0.0
    %147 = vmatprep.subr.mxu0 0.0
    %148 = vmatpush1.msra.mxu0 0.0
    %149 = vmatprep.subr.mxu0 0.0
    %150 = vmatpush1.msra.mxu0 0.0
    %151 = vmatprep.subr.mxu0 0.0
    %152 = vmatpush1.msra.mxu0 0.0
    %153 = vmatprep.subr.mxu0 0.0
    %154 = vmatpush1.msra.mxu0 0.0
    %155 = vmatprep.subr.mxu0 0.0
    %156 = vmatpush1.msra.mxu0 0.0
    %157 = vmatprep.subr.mxu0 0.0
    %158 = vmatpush1.msra.mxu0 0.0
    %159 = vmatprep.subr.mxu0 0.0
    %160 = vmatpush1.msra.mxu0 0.0
    %161 = vmatprep.subr.mxu0 0.0
    %162 = vmatpush1.msra.mxu0 0.0
    %163 = vmatprep.subr.mxu0 0.0
    %164 = vmatpush1.msra.mxu0 0.0
    %165 = vmatprep.subr.mxu0 0.0
    %166 = vmatpush1.msra.mxu0 0.0
    %167 = vmatprep.subr.mxu0 0.0
    %168 = vmatpush1.msra.mxu0 0.0
    %169 = vmatprep.subr.mxu0 0.0
    %170 = vmatpush1.msra.mxu0 0.0
    %171 = vmatprep.subr.mxu0 0.0
    %172 = vmatpush1.msra.mxu0 0.0
    %173 = vmatprep.subr.mxu0 0.0
    %174 = vmatpush1.msra.mxu0 0.0
    %175 = vmatprep.subr.mxu0 0.0
    %176 = vmatpush1.msra.mxu0 0.0
    %177 = vmatprep.subr.mxu0 0.0
    %178 = vmatpush1.msra.mxu0 0.0
    %179 = vmatprep.subr.mxu0 0.0
    %180 = vmatpush1.msra.mxu0 0.0
    %181 = vmatprep.subr.mxu0 0.0
    %182 = vmatpush1.msra.mxu0 0.0
    %183 = vmatprep.subr.mxu0 0.0
    %184 = vmatpush1.msra.mxu0 0.0
    %185 = vmatprep.mubr.f32.mxu0 0.0
    %186 = vmatmul.mubr.f32.gmra.mrb[0].mxu0 %v119
    %v187 = vpop.f32.mrb[0].mxu0
    %v188 = vadd.f32 %v115, %v187
    %v189 = vpop.f32.mrb[0].mxu0
    %190 = vdwg.mxu0
    %v191 = vtanh.pop %v188
    %v192 = vadd.f32 %v191, 1.0
    %v193 = vmul.f32 %v192, 3.1415927
    %v194 = vmax.f32 %v188, 0.0
    %v195 = vand.u32 2147483647, %v188
    %v196 = vsub.f32 0.0, %v195
    %v197 = vmul.f32 %v196, 1.442695
    %v198 = vpow.pop %v197
    %v199 = vadd.f32 %v198, 1.0
    %v200 = vlog2.pop %v199
    %v201 = vmul.f32 %v200, 0.6931472
    %v202 = vmul.f32 -0.5, %v198
    %v203 = vadd.f32 %v202, 1.0
    %v204 = vmul.f32 %v203, %v198
    %v205 = vand.u32 2147483647, %v198
    %vm206 = vcmp.lt.f32.partialorder %v205, 0.0004427343
    %v207 = vsel %vm206, %v204, %v201
    %v208 = vadd.f32 %v194, %v207
    %v209 = vlaneseq
    %v210 = vand.u32 %v209, 127
    %vm211 = vcmp.lt.s32.totalorder %v210, 8
    %v212 = vsel %vm211, %v193, %v208
    %vm213 = vcmask 123904
    %214 = vst.msk [vmem:[#allocation2] sm:$0x3] %vm213, %v212
    // Predicated region
    $region22: #{tpu_custom_call.1} parent=1 // pred_check
      _
    $region23: #{tpu_custom_call.1} parent=1 // pred_check_branch
      %216 = sbr.rel (0) target = $region25
    $region24: #{tpu_custom_call.1} parent=1 // pred_region
      %s218 = ssub.s32 32, 32
      %219 = vsyncadd [#allocation3], %s218
      %s221 = sshll.u32 [#allocation2], 4
      %s222 = int_to_ptr.vmem [resolvable:$true] %s221
      %224 = dma.vmem_to_hbm [thread:$0]  %s222, 32, %s5, [#allocation3]
    $region25: #{tpu_custom_call.1} parent=1 // pred_fallthru
      _
    // Predicated region
    $region26: #{tpu_custom_call.1} parent=1 // pred_check
      _
    $region27: #{tpu_custom_call.1} parent=1 // pred_check_branch
      %226 = sbr.rel (0) target = $region29
    $region28: #{tpu_custom_call.1} parent=1 // pred_region
      %227 = dma.done [#allocation3], 32
    $region29: #{tpu_custom_call.1} parent=1 // pred_fallthru
      _
    %228 = vsyncpa [#allocation3], 1

</llo_original>
